<compile_context>
chip_gen: v5e
topology: v5e:2x2
jax: 0.10.0
libtpu: 0.0.40
codegen_flags: <defaults>
</compile_context>

<pallas_src>
import jax
import jax.numpy as jnp
from jax import lax
from jax.experimental import pallas as pl
from jax.experimental.pallas import tpu as pltpu


def _round_up(v, m):
    return (v + m - 1) // m * m


_INNER_CHUNK = 256  # rows per in-kernel sub-tile (keeps h1/h2 out of VMEM spill traffic)


def _mlp_kernel(x_ref, w1_ref, b1_ref, w2_ref, b2_ref, w3_ref, b3_ref, o_ref):
    bm = x_ref.shape[0]
    # Sub-chunk the batch tile so intermediates stay small; fall back to the
    # whole tile when it is small or not divisible by the chunk size.
    rows = _INNER_CHUNK if (bm > _INNER_CHUNK and bm % _INNER_CHUNK == 0) else bm
    n_chunks = bm // rows

    # Weights/biases are VMEM-resident across grid steps (constant index_map);
    # read them once per step.
    w1 = w1_ref[...]
    b1 = b1_ref[...]
    w2 = w2_ref[...]
    b2 = b2_ref[...]
    w3 = w3_ref[...]
    b3 = b3_ref[...]

    def _compute(x):
        # fc1 + ReLU (bias add / ReLU in f32)
        h1 = jnp.dot(x, w1, preferred_element_type=jnp.float32)
        h1 = jnp.maximum(h1 + b1, 0.0).astype(w2.dtype)
        # fc2 + ReLU
        h2 = jnp.dot(h1, w2, preferred_element_type=jnp.float32)
        h2 = jnp.maximum(h2 + b2, 0.0).astype(w3.dtype)
        # fc3 (no activation); output block is lane-dense (128-col padded)
        o = jnp.dot(h2, w3, preferred_element_type=jnp.float32) + b3
        return o

    if n_chunks == 1:
        o_ref[...] = _compute(x_ref[...]).astype(o_ref.dtype)
    else:
        def chunk_body(c, carry):
            r0 = pl.multiple_of(c * rows, rows)
            o = _compute(x_ref[pl.ds(r0, rows), :])
            o_ref[pl.ds(r0, rows), :] = o.astype(o_ref.dtype)
            return carry

        lax.fori_loop(0, n_chunks, chunk_body, 0, unroll=True)


def _mlp_forward_impl(x, params, *, n_out, bm=1024):
    """Fused 3-layer MLP forward. `params` must come from prepare_params()."""
    w1, b1 = params["w1"], params["b1"]
    w2, b2 = params["w2"], params["b2"]
    w3, b3 = params["w3"], params["b3"]

    B, n_in = x.shape
    h1p = w1.shape[1]
    h2p = w2.shape[1]
    n_out_p = w3.shape[1]

    # Match matmul operand dtype (no-op for f32; halves x DMA if bf16 weights).
    x = x.astype(w1.dtype)

    # --- batch tiling -------------------------------------------------------
    Bp8 = _round_up(B, 8)
    bm = _round_up(max(8, bm), 8)          # respect the (8,128) constraint
    bm = min(bm, Bp8)
    # v7x has 2 TensorCores and shards "parallel" grid axes across them: make
    # sure a reasonably large batch yields at least 2 grid steps.
    if Bp8 >= 64:
        bm = min(bm, max(8, (Bp8 // 2) // 8 * 8))
    Bp = _round_up(B, bm)
    xp = jnp.pad(x, ((0, Bp - B), (0, 0))) if Bp != B else x

    grid = (Bp // bm,)

    flops = 2 * Bp * (n_in * h1p + h1p * h2p + h2p * n_out_p)
    bytes_accessed = int(
        xp.size * xp.dtype.itemsize
        + Bp * n_out_p * 4
        + sum(a.size * a.dtype.itemsize for a in (w1, b1, w2, b2, w3, b3))
    )

    # x / out are tiled over the batch axis; weights & biases are full blocks
    # with a constant index_map, so they stay resident in VMEM across steps.
    in_specs = [
        pl.BlockSpec((bm, n_in), lambda i: (i, 0)),
        pl.BlockSpec(w1.shape, lambda i: (0, 0)),
        pl.BlockSpec(b1.shape, lambda i: (0, 0)),
        pl.BlockSpec(w2.shape, lambda i: (0, 0)),
        pl.BlockSpec(b2.shape, lambda i: (0, 0)),
        pl.BlockSpec(w3.shape, lambda i: (0, 0)),
        pl.BlockSpec(b3.shape, lambda i: (0, 0)),
    ]
    out_specs = pl.BlockSpec((bm, n_out_p), lambda i: (i, 0))

    out = pl.pallas_call(
        _mlp_kernel,
        out_shape=jax.ShapeDtypeStruct((Bp, n_out_p), jnp.float32),
        grid_spec=pltpu.PrefetchScalarGridSpec(
            num_scalar_prefetch=0,
            grid=grid,
            in_specs=in_specs,
            out_specs=out_specs,
        ),
        compiler_params=pltpu.CompilerParams(
            dimension_semantics=("parallel",),
            # 32 MiB: raises v5e's 16 MiB default, safe on v7x (64 MiB VMEM).
            vmem_limit_bytes=32 * 1024 * 1024,
        ),
        cost_estimate=pl.CostEstimate(
            flops=flops, transcendentals=0, bytes_accessed=bytes_accessed
        ),
    )(xp, w1, b1, w2, b2, w3, b3)

    # strip batch padding and output-column padding (fused under jit)
    return out[:B, :n_out]


# jit the wrapper so the batch pad / final slice fuse with the kernel call and
# per-call dispatch overhead disappears.  n_out and bm control shapes -> static.
mlp_forward = jax.jit(_mlp_forward_impl, static_argnames=("n_out", "bm"))


def prepare_params(params, matmul_dtype=jnp.float32):
    """One-time padding of hidden/output dims to multiples of 128.

    Zero padding is exact: padded hidden units have zero weights+bias, so
    relu(0)=0 contributes nothing; padded output columns are sliced off.
    Optionally casts the matmul operands to bf16 (biases stay f32).
    """
    w1, b1 = params["w1"], params["b1"]
    w2, b2 = params["w2"], params["b2"]
    w3, b3 = params["w3"], params["b3"]
    h1, h2, n_out = w1.shape[1], w2.shape[1], w3.shape[1]
    h1p, h2p, n_out_p = _round_up(h1, 128), _round_up(h2, 128), _round_up(n_out, 128)
    return {
        "w1": jnp.pad(w1, ((0, 0), (0, h1p - h1))).astype(matmul_dtype),
        "b1": jnp.pad(b1, ((0, 0), (0, h1p - h1))).astype(jnp.float32),
        "w2": jnp.pad(w2, ((0, h1p - h1), (0, h2p - h2))).astype(matmul_dtype),
        "b2": jnp.pad(b2, ((0, 0), (0, h2p - h2))).astype(jnp.float32),
        "w3": jnp.pad(w3, ((0, h2p - h2), (0, n_out_p - n_out))).astype(matmul_dtype),
        "b3": jnp.pad(b3, ((0, 0), (0, n_out_p - n_out))).astype(jnp.float32),
    }


def init_params(key, n_input, n_output, dtype=jnp.float32):
    """Deterministic init mirroring nn.Linear's U(-1/sqrt(fan_in), 1/sqrt(fan_in))."""
    dims = [(n_input, 50), (50, 200), (200, n_output)]
    params = {}
    for li, (fan_in, fan_out) in enumerate(dims, start=1):
        key, kw, kb = jax.random.split(key, 3)
        bound = 1.0 / jnp.sqrt(jnp.asarray(fan_in, dtype))
        # store transposed vs torch: (in, out)
        params[f"w{li}"] = jax.random.uniform(
            kw, (fan_in, fan_out), dtype, minval=-bound, maxval=bound
        )
        params[f"b{li}"] = jax.random.uniform(
            kb, (1, fan_out), dtype, minval=-bound, maxval=bound
        )
    return params


def mlp_reference(x, params):
    h1 = jnp.maximum(x @ params["w1"] + params["b1"], 0.0)
    h2 = jnp.maximum(h1 @ params["w2"] + params["b2"], 0.0)
    return h2 @ params["w3"] + params["b3"]


if __name__ == "__main__":
    key = jax.random.PRNGKey(0)
    n_input, n_output = 32, 16

    key, kx = jax.random.split(key)
    params = init_params(key, n_input, n_output)
    padded = prepare_params(params)  # one-time padding, outside the hot path

    # 1) small batch -> single grid step, whole-tile kernel path
    x = jax.random.normal(kx, (16, n_input), dtype=jnp.float32)
    out = jax.block_until_ready(mlp_forward(x, padded, n_out=n_output, bm=1024))
    ref = mlp_reference(x, params)
    assert out.shape == (16, n_output)
    assert jnp.allclose(out, ref, atol=1e-4, rtol=1e-4), "mismatch vs reference"

    # 2) non-tile-divisible batch -> batch padding + 2 parallel grid steps
    xb = jax.random.normal(jax.random.PRNGKey(1), (300, n_input), dtype=jnp.float32)
    outb = jax.block_until_ready(mlp_forward(xb, padded, n_out=n_output, bm=1024))
    refb = mlp_reference(xb, params)
    assert outb.shape == (300, n_output)
    assert jnp.allclose(outb, refb, atol=1e-4, rtol=1e-4), "mismatch (padded batch)"

    # 3) larger batch -> 2 grid steps of 512 rows, exercising the in-kernel
    #    256-row sub-chunk loop
    xc = jax.random.normal(jax.random.PRNGKey(2), (1024, n_input), dtype=jnp.float32)
    outc = jax.block_until_ready(mlp_forward(xc, padded, n_out=n_output, bm=1024))
    refc = mlp_reference(xc, params)
    assert outc.shape == (1024, n_output)
    assert jnp.allclose(outc, refc, atol=1e-4, rtol=1e-4), "mismatch (chunked tile)"

    print("KERNEL_OK")
</pallas_src>

<mosaic_0001>
module attributes {stable_mosaic.version = 11 : i64} {
  func.func @_mlp_kernel(%arg0: i32, %arg1: memref<16x32xf32, #tpu.memory_space<vmem>>, %arg2: memref<32x128xf32, #tpu.memory_space<vmem>>, %arg3: memref<1x128xf32, #tpu.memory_space<vmem>>, %arg4: memref<128x256xf32, #tpu.memory_space<vmem>>, %arg5: memref<1x256xf32, #tpu.memory_space<vmem>>, %arg6: memref<256x128xf32, #tpu.memory_space<vmem>>, %arg7: memref<1x128xf32, #tpu.memory_space<vmem>>, %arg8: memref<16x128xf32, #tpu.memory_space<vmem>>) attributes {dimension_semantics = [#tpu.dimension_semantics<parallel>], iteration_bounds = array<i64: 1>, scalar_prefetch = 0 : i64, scratch_operands = 0 : i64, tpu.core_type = #tpu.core_type<tc>, window_params = [{transform_indices = @transform_0, window_bounds = array<i64: 16, 32>}, {pipeline_mode = #tpu.pipeline_mode<synchronous>, transform_indices = @transform_1, window_bounds = array<i64: 32, 128>}, {pipeline_mode = #tpu.pipeline_mode<synchronous>, transform_indices = @transform_2, window_bounds = array<i64: 1, 128>}, {pipeline_mode = #tpu.pipeline_mode<synchronous>, transform_indices = @transform_3, window_bounds = array<i64: 128, 256>}, {pipeline_mode = #tpu.pipeline_mode<synchronous>, transform_indices = @transform_4, window_bounds = array<i64: 1, 256>}, {pipeline_mode = #tpu.pipeline_mode<synchronous>, transform_indices = @transform_5, window_bounds = array<i64: 256, 128>}, {pipeline_mode = #tpu.pipeline_mode<synchronous>, transform_indices = @transform_6, window_bounds = array<i64: 1, 128>}, {transform_indices = @transform_7, window_bounds = array<i64: 16, 128>}]} {
    %c0 = arith.constant 0 : index
    %c0_0 = arith.constant 0 : index
    %0 = vector.load %arg2[%c0, %c0_0] : memref<32x128xf32, #tpu.memory_space<vmem>>, vector<32x128xf32>
    %c0_1 = arith.constant 0 : index
    %c0_2 = arith.constant 0 : index
    %1 = vector.load %arg3[%c0_1, %c0_2] : memref<1x128xf32, #tpu.memory_space<vmem>>, vector<1x128xf32>
    %c0_3 = arith.constant 0 : index
    %c0_4 = arith.constant 0 : index
    %2 = vector.load %arg4[%c0_3, %c0_4] : memref<128x256xf32, #tpu.memory_space<vmem>>, vector<128x256xf32>
    %c0_5 = arith.constant 0 : index
    %c0_6 = arith.constant 0 : index
    %3 = vector.load %arg5[%c0_5, %c0_6] : memref<1x256xf32, #tpu.memory_space<vmem>>, vector<1x256xf32>
    %c0_7 = arith.constant 0 : index
    %c0_8 = arith.constant 0 : index
    %4 = vector.load %arg6[%c0_7, %c0_8] : memref<256x128xf32, #tpu.memory_space<vmem>>, vector<256x128xf32>
    %c0_9 = arith.constant 0 : index
    %c0_10 = arith.constant 0 : index
    %5 = vector.load %arg7[%c0_9, %c0_10] : memref<1x128xf32, #tpu.memory_space<vmem>>, vector<1x128xf32>
    %c0_11 = arith.constant 0 : index
    %c0_12 = arith.constant 0 : index
    %6 = vector.load %arg1[%c0_11, %c0_12] : memref<16x32xf32, #tpu.memory_space<vmem>>, vector<16x32xf32>
    %cst = arith.constant dense<0.000000e+00> : vector<16x128xf32>
    %7 = tpu.matmul %6, %0, %cst {dimension_numbers = #tpu.dot_dimension_numbers<[1], [0], [0], [1], [0, 0, 1, 1], [], []>} : vector<16x32xf32>, vector<32x128xf32>, vector<16x128xf32> -> vector<16x128xf32>
    %8 = vector.broadcast %1 : vector<1x128xf32> to vector<16x128xf32>
    %9 = arith.addf %7, %8 : vector<16x128xf32>
    %cst_13 = arith.constant 0.000000e+00 : f32
    %10 = vector.broadcast %cst_13 : f32 to vector<16x128xf32>
    %11 = arith.maximumf %9, %10 : vector<16x128xf32>
    %cst_14 = arith.constant dense<0.000000e+00> : vector<16x256xf32>
    %12 = tpu.matmul %11, %2, %cst_14 {dimension_numbers = #tpu.dot_dimension_numbers<[1], [0], [0], [1], [0, 0, 1, 1], [], []>} : vector<16x128xf32>, vector<128x256xf32>, vector<16x256xf32> -> vector<16x256xf32>
    %13 = vector.broadcast %3 : vector<1x256xf32> to vector<16x256xf32>
    %14 = arith.addf %12, %13 : vector<16x256xf32>
    %cst_15 = arith.constant 0.000000e+00 : f32
    %15 = vector.broadcast %cst_15 : f32 to vector<16x256xf32>
    %16 = arith.maximumf %14, %15 : vector<16x256xf32>
    %cst_16 = arith.constant dense<0.000000e+00> : vector<16x128xf32>
    %17 = tpu.matmul %16, %4, %cst_16 {dimension_numbers = #tpu.dot_dimension_numbers<[1], [0], [0], [1], [0, 0, 1, 1], [], []>} : vector<16x256xf32>, vector<256x128xf32>, vector<16x128xf32> -> vector<16x128xf32>
    %18 = vector.broadcast %5 : vector<1x128xf32> to vector<16x128xf32>
    %19 = arith.addf %17, %18 : vector<16x128xf32>
    %c0_17 = arith.constant 0 : index
    %c0_18 = arith.constant 0 : index
    %20 = vector.load %arg8[%c0_17, %c0_18] : memref<16x128xf32, #tpu.memory_space<vmem>>, vector<16x128xf32>
    tpu.vector_store %arg8[%c0_17, %c0_18], %19 {strides = array<i32>} : memref<16x128xf32, #tpu.memory_space<vmem>>, vector<16x128xf32>,
    return
  }
  func.func @transform_0(%arg0: i32) -> (i32, i32) {
    %c0_i32 = arith.constant 0 : i32
    %c0_i32_0 = arith.constant 0 : i32
    return %arg0, %c0_i32 : i32, i32
  }
  func.func @transform_1(%arg0: i32) -> (i32, i32) {
    %c0_i32 = arith.constant 0 : i32
    %c0_i32_0 = arith.constant 0 : i32
    %c0_i32_1 = arith.constant 0 : i32
    return %c0_i32, %c0_i32_0 : i32, i32
  }
  func.func @transform_2(%arg0: i32) -> (i32, i32) {
    %c0_i32 = arith.constant 0 : i32
    %c0_i32_0 = arith.constant 0 : i32
    %c0_i32_1 = arith.constant 0 : i32
    return %c0_i32, %c0_i32_0 : i32, i32
  }
  func.func @transform_3(%arg0: i32) -> (i32, i32) {
    %c0_i32 = arith.constant 0 : i32
    %c0_i32_0 = arith.constant 0 : i32
    %c0_i32_1 = arith.constant 0 : i32
    return %c0_i32, %c0_i32_0 : i32, i32
  }
  func.func @transform_4(%arg0: i32) -> (i32, i32) {
    %c0_i32 = arith.constant 0 : i32
    %c0_i32_0 = arith.constant 0 : i32
    %c0_i32_1 = arith.constant 0 : i32
    return %c0_i32, %c0_i32_0 : i32, i32
  }
  func.func @transform_5(%arg0: i32) -> (i32, i32) {
    %c0_i32 = arith.constant 0 : i32
    %c0_i32_0 = arith.constant 0 : i32
    %c0_i32_1 = arith.constant 0 : i32
    return %c0_i32, %c0_i32_0 : i32, i32
  }
  func.func @transform_6(%arg0: i32) -> (i32, i32) {
    %c0_i32 = arith.constant 0 : i32
    %c0_i32_0 = arith.constant 0 : i32
    %c0_i32_1 = arith.constant 0 : i32
    return %c0_i32, %c0_i32_0 : i32, i32
  }
  func.func @transform_7(%arg0: i32) -> (i32, i32) {
    %c0_i32 = arith.constant 0 : i32
    %c0_i32_0 = arith.constant 0 : i32
    return %arg0, %c0_i32 : i32, i32
  }
}

</mosaic_0001>

<llo_original>
// kernel: _mlp_forward_impl.1
$region0: #{_mlp_forward_impl.1}
  #allocation0 [shape = 'u32[]', space=smem, size = 0x4, offset = 0x4, fixed_abs, tag = 'smem constant byte address 0x4 - core index']
  #allocation1 [shape = 'u32[72,128]{1,0:T(1,128)}', space=vmem, size = 0x9000, scoped, tag = 'internal scratch']
  %s0 = inlined_call_operand.hbm [shape: f32[16,32], index: 0, kind: input, shape index: {}]
  %s1 = inlined_call_operand.hbm [shape: f32[32,128], index: 1, kind: input, shape index: {}]
  %s2 = inlined_call_operand.hbm [shape: f32[1,128], index: 2, kind: input, shape index: {}]
  %s3 = inlined_call_operand.hbm [shape: f32[128,256], index: 3, kind: input, shape index: {}]
  %s4 = inlined_call_operand.hbm [shape: f32[1,256], index: 4, kind: input, shape index: {}]
  %s5 = inlined_call_operand.hbm [shape: f32[256,128], index: 5, kind: input, shape index: {}]
  %s6 = inlined_call_operand.vmem [shape: f32[1,128], index: 6, kind: input, shape index: {}]
  %s7 = inlined_call_operand.hbm [shape: f32[16,128], index: 7, kind: output, shape index: {}]
  %s8 = sld [smem:[#allocation0]]
  $region62: #{_mlp_forward_impl.1} parent=0
    _
  %s10 = ssub.s32 1, %s8
  %s11 = scalar_select 0, %s10, %s8
  $region1: #{_mlp_forward_impl.1} parent=0
    #allocation2 [shape = 'u8[8192]{0}', space=vmem, size = 0x2000, scoped, tag = 'input window, operand 0, single buffered']
    #allocation3 [shape = 's32[1]{0}', space=sflag, size = 0x4, scoped, tag = 'scoped memory for _mlp_forward_impl.1']
    #allocation4 [shape = 's32[1]{0}', space=sflag, size = 0x4, scoped, tag = 'scoped memory for _mlp_forward_impl.1']
    #allocation5 [shape = 'u8[16384]{0}', space=vmem, size = 0x4000, scoped, tag = 'input window, operand 1, single buffered']
    #allocation6 [shape = 's32[1]{0}', space=sflag, size = 0x4, scoped, tag = 'scoped memory for _mlp_forward_impl.1']
    #allocation7 [shape = 'u8[512]{0}', space=vmem, size = 0x400, scoped, tag = 'input window, operand 2, single buffered']
    #allocation8 [shape = 'u8[131072]{0}', space=vmem, size = 0x20000, scoped, tag = 'input window, operand 3, single buffered']
    #allocation9 [shape = 's32[1]{0}', space=sflag, size = 0x4, scoped, tag = 'scoped memory for _mlp_forward_impl.1']
    #allocation10 [shape = 'u8[1024]{0}', space=vmem, size = 0x400, scoped, tag = 'input window, operand 4, single buffered']
    #allocation11 [shape = 'u8[131072]{0}', space=vmem, size = 0x20000, scoped, tag = 'input window, operand 5, single buffered']
    #allocation12 [shape = 's32[1]{0}', space=sflag, size = 0x4, scoped, tag = 'scoped memory for _mlp_forward_impl.1']
    #allocation13 [shape = 'u8[8192]{0}', space=vmem, size = 0x2000, scoped, tag = 'output window, operand 0, single buffered']
    %12 = vsyncpa [#allocation3], 0
    %13 = vsyncpa [#allocation6], 0
    %14 = vsyncpa [#allocation9], 0
    %15 = vsyncpa [#allocation12], 0
    %16 = vsyncpa [#allocation4], 0
    // Predicated region
    $region2: #{_mlp_forward_impl.1} parent=1 // pred_check
      _
    $region3: #{_mlp_forward_impl.1} parent=1 // pred_check_branch
      %18 = sbr.rel (0) target = $region5
    $region4: #{_mlp_forward_impl.1} parent=1 // pred_region
      %20 = vsyncadd [#allocation3], 0
      %s21 = sshll.u32 %s0, 4
      %s22 = int_to_ptr.hbm [resolvable:$true] %s21
      %s23 = sshll.u32 [#allocation2], 4
      %s24 = int_to_ptr.vmem [resolvable:$true] %s23
      %29 = dma.hbm_to_vmem [thread:$0]  %s22, 256, %s24, [#allocation3], 128, 128, 8
    $region5: #{_mlp_forward_impl.1} parent=1 // pred_fallthru
      _
    // Predicated region
    $region6: #{_mlp_forward_impl.1} parent=1 // pred_check
      _
    $region7: #{_mlp_forward_impl.1} parent=1 // pred_check_branch
      %31 = sbr.rel (0) target = $region9
    $region8: #{_mlp_forward_impl.1} parent=1 // pred_region
      %33 = vsyncadd [#allocation6], 0
      %s34 = sshll.u32 %s1, 4
      %s35 = int_to_ptr.hbm [resolvable:$true] %s34
      %s36 = sshll.u32 [#allocation5], 4
      %s37 = int_to_ptr.vmem [resolvable:$true] %s36
      %42 = dma.hbm_to_vmem [thread:$0]  %s35, 512, %s37, [#allocation6], 128, 128, 8
    $region9: #{_mlp_forward_impl.1} parent=1 // pred_fallthru
      _
    // Predicated region
    $region10: #{_mlp_forward_impl.1} parent=1 // pred_check
      _
    $region11: #{_mlp_forward_impl.1} parent=1 // pred_check_branch
      %44 = sbr.rel (0) target = $region13
    $region12: #{_mlp_forward_impl.1} parent=1 // pred_region
      %46 = vsyncadd [#allocation6], 0
      %s48 = sshll.u32 %s2, 4
      %s49 = int_to_ptr.hbm [resolvable:$true] %s48
      %s50 = sshll.u32 [#allocation7], 4
      %s51 = int_to_ptr.vmem [resolvable:$true] %s50
      %53 = dma.hbm_to_vmem [thread:$0]  %s49, 16, %s51, [#allocation6]
    $region13: #{_mlp_forward_impl.1} parent=1 // pred_fallthru
      _
    // Predicated region
    $region14: #{_mlp_forward_impl.1} parent=1 // pred_check
      _
    $region15: #{_mlp_forward_impl.1} parent=1 // pred_check_branch
      %55 = sbr.rel (0) target = $region17
    $region16: #{_mlp_forward_impl.1} parent=1 // pred_region
      %57 = vsyncadd [#allocation9], 0
      %s58 = sshll.u32 %s3, 4
      %s59 = int_to_ptr.hbm [resolvable:$true] %s58
      %s60 = sshll.u32 [#allocation8], 4
      %s61 = int_to_ptr.vmem [resolvable:$true] %s60
      %66 = dma.hbm_to_vmem [thread:$0]  %s59, 4096, %s61, [#allocation9], 256, 256, 16
    $region17: #{_mlp_forward_impl.1} parent=1 // pred_fallthru
      _
    // Predicated region
    $region18: #{_mlp_forward_impl.1} parent=1 // pred_check
      _
    $region19: #{_mlp_forward_impl.1} parent=1 // pred_check_branch
      %68 = sbr.rel (0) target = $region21
    $region20: #{_mlp_forward_impl.1} parent=1 // pred_region
      %70 = vsyncadd [#allocation9], 0
      %s72 = sshll.u32 %s4, 4
      %s73 = int_to_ptr.hbm [resolvable:$true] %s72
      %s74 = sshll.u32 [#allocation10], 4
      %s75 = int_to_ptr.vmem [resolvable:$true] %s74
      %77 = dma.hbm_to_vmem [thread:$0]  %s73, 32, %s75, [#allocation9]
    $region21: #{_mlp_forward_impl.1} parent=1 // pred_fallthru
      _
    // Predicated region
    $region22: #{_mlp_forward_impl.1} parent=1 // pred_check
      _
    $region23: #{_mlp_forward_impl.1} parent=1 // pred_check_branch
      %79 = sbr.rel (0) target = $region25
    $region24: #{_mlp_forward_impl.1} parent=1 // pred_region
      %81 = vsyncadd [#allocation12], 0
      %s82 = sshll.u32 %s5, 4
      %s83 = int_to_ptr.hbm [resolvable:$true] %s82
      %s84 = sshll.u32 [#allocation11], 4
      %s85 = int_to_ptr.vmem [resolvable:$true] %s84
      %90 = dma.hbm_to_vmem [thread:$0]  %s83, 4096, %s85, [#allocation12], 128, 128, 8
    $region25: #{_mlp_forward_impl.1} parent=1 // pred_fallthru
      _
    // Predicated region
    $region26: #{_mlp_forward_impl.1} parent=1 // pred_check
      _
    $region27: #{_mlp_forward_impl.1} parent=1 // pred_check_branch
      %92 = sbr.rel (0) target = $region29
    $region28: #{_mlp_forward_impl.1} parent=1 // pred_region
      _
    $region29: #{_mlp_forward_impl.1} parent=1 // pred_fallthru
      _
    // Predicated region
    $region30: #{_mlp_forward_impl.1} parent=1 // pred_check
      _
    $region31: #{_mlp_forward_impl.1} parent=1 // pred_check_branch
      %94 = sbr.rel (0) target = $region33
    $region32: #{_mlp_forward_impl.1} parent=1 // pred_region
      %96 = dma.done [#allocation3], 256
    $region33: #{_mlp_forward_impl.1} parent=1 // pred_fallthru
      _
    // Predicated region
    $region34: #{_mlp_forward_impl.1} parent=1 // pred_check
      _
    $region35: #{_mlp_forward_impl.1} parent=1 // pred_check_branch
      %98 = sbr.rel (0) target = $region37
    $region36: #{_mlp_forward_impl.1} parent=1 // pred_region
      %100 = dma.done [#allocation6], 512
    $region37: #{_mlp_forward_impl.1} parent=1 // pred_fallthru
      _
    // Predicated region
    $region38: #{_mlp_forward_impl.1} parent=1 // pred_check
      _
    $region39: #{_mlp_forward_impl.1} parent=1 // pred_check_branch
      %102 = sbr.rel (0) target = $region41
    $region40: #{_mlp_forward_impl.1} parent=1 // pred_region
      %104 = dma.done [#allocation6], 16
    $region41: #{_mlp_forward_impl.1} parent=1 // pred_fallthru
      _
    // Predicated region
    $region42: #{_mlp_forward_impl.1} parent=1 // pred_check
      _
    $region43: #{_mlp_forward_impl.1} parent=1 // pred_check_branch
      %106 = sbr.rel (0) target = $region45
    $region44: #{_mlp_forward_impl.1} parent=1 // pred_region
      %108 = dma.done [#allocation9], 4096
    $region45: #{_mlp_forward_impl.1} parent=1 // pred_fallthru
      _
    // Predicated region
    $region46: #{_mlp_forward_impl.1} parent=1 // pred_check
      _
    $region47: #{_mlp_forward_impl.1} parent=1 // pred_check_branch
      %110 = sbr.rel (0) target = $region49
    $region48: #{_mlp_forward_impl.1} parent=1 // pred_region
      %112 = dma.done [#allocation9], 32
    $region49: #{_mlp_forward_impl.1} parent=1 // pred_fallthru
      _
    // Predicated region
    $region50: #{_mlp_forward_impl.1} parent=1 // pred_check
      _
    $region51: #{_mlp_forward_impl.1} parent=1 // pred_check_branch
      %114 = sbr.rel (0) target = $region53
    $region52: #{_mlp_forward_impl.1} parent=1 // pred_region
      %116 = dma.done [#allocation12], 4096
    $region53: #{_mlp_forward_impl.1} parent=1 // pred_fallthru
      _
    %v117 = vld [vmem:[#allocation5] sm:$0xff]
    %v118 = vld [vmem:[#allocation5 + $0x8] sm:$0xff]
    %v119 = vld [vmem:[#allocation5 + $0x10] sm:$0xff]
    %v120 = vld [vmem:[#allocation5 + $0x18] sm:$0xff]
    %v121 = vld [vmem:[#allocation7] sm:$0x1]
    %v122 = vld [vmem:[#allocation8] sm:$0xff]
    %v123 = vld [vmem:[#allocation8 + $0x8] sm:$0xff]
    %v124 = vld [vmem:[#allocation8 + $0x10] sm:$0xff]
    %v125 = vld [vmem:[#allocation8 + $0x18] sm:$0xff]
    %v126 = vld [vmem:[#allocation8 + $0x20] sm:$0xff]
    %v127 = vld [vmem:[#allocation8 + $0x28] sm:$0xff]
    %v128 = vld [vmem:[#allocation8 + $0x30] sm:$0xff]
    %v129 = vld [vmem:[#allocation8 + $0x38] sm:$0xff]
    %v130 = vld [vmem:[#allocation8 + $0x40] sm:$0xff]
    %v131 = vld [vmem:[#allocation8 + $0x48] sm:$0xff]
    %v132 = vld [vmem:[#allocation8 + $0x50] sm:$0xff]
    %v133 = vld [vmem:[#allocation8 + $0x58] sm:$0xff]
    %v134 = vld [vmem:[#allocation8 + $0x60] sm:$0xff]
    %v135 = vld [vmem:[#allocation8 + $0x68] sm:$0xff]
    %v136 = vld [vmem:[#allocation8 + $0x70] sm:$0xff]
    %v137 = vld [vmem:[#allocation8 + $0x78] sm:$0xff]
    %v138 = vld [vmem:[#allocation8 + $0x80] sm:$0xff]
    %v139 = vld [vmem:[#allocation8 + $0x88] sm:$0xff]
    %v140 = vld [vmem:[#allocation8 + $0x90] sm:$0xff]
    %v141 = vld [vmem:[#allocation8 + $0x98] sm:$0xff]
    %v142 = vld [vmem:[#allocation8 + $0xa0] sm:$0xff]
    %v143 = vld [vmem:[#allocation8 + $0xa8] sm:$0xff]
    %v144 = vld [vmem:[#allocation8 + $0xb0] sm:$0xff]
    %v145 = vld [vmem:[#allocation8 + $0xb8] sm:$0xff]
    %v146 = vld [vmem:[#allocation8 + $0xc0] sm:$0xff]
    %v147 = vld [vmem:[#allocation8 + $0xc8] sm:$0xff]
    %v148 = vld [vmem:[#allocation8 + $0xd0] sm:$0xff]
    %v149 = vld [vmem:[#allocation8 + $0xd8] sm:$0xff]
    %v150 = vld [vmem:[#allocation8 + $0xe0] sm:$0xff]
    %v151 = vld [vmem:[#allocation8 + $0xe8] sm:$0xff]
    %v152 = vld [vmem:[#allocation8 + $0xf0] sm:$0xff]
    %v153 = vld [vmem:[#allocation8 + $0xf8] sm:$0xff]
    %v154 = vld [vmem:[#allocation10] sm:$0x3]
    %v155 = vld [vmem:[#allocation11] sm:$0xff]
    %v156 = vld [vmem:[#allocation11 + $0x8] sm:$0xff]
    %v157 = vld [vmem:[#allocation11 + $0x10] sm:$0xff]
    %v158 = vld [vmem:[#allocation11 + $0x18] sm:$0xff]
    %v159 = vld [vmem:[#allocation11 + $0x20] sm:$0xff]
    %v160 = vld [vmem:[#allocation11 + $0x28] sm:$0xff]
    %v161 = vld [vmem:[#allocation11 + $0x30] sm:$0xff]
    %v162 = vld [vmem:[#allocation11 + $0x38] sm:$0xff]
    %v163 = vld [vmem:[#allocation11 + $0x40] sm:$0xff]
    %v164 = vld [vmem:[#allocation11 + $0x48] sm:$0xff]
    %v165 = vld [vmem:[#allocation11 + $0x50] sm:$0xff]
    %v166 = vld [vmem:[#allocation11 + $0x58] sm:$0xff]
    %v167 = vld [vmem:[#allocation11 + $0x60] sm:$0xff]
    %v168 = vld [vmem:[#allocation11 + $0x68] sm:$0xff]
    %v169 = vld [vmem:[#allocation11 + $0x70] sm:$0xff]
    %v170 = vld [vmem:[#allocation11 + $0x78] sm:$0xff]
    %v171 = vld [vmem:[#allocation11 + $0x80] sm:$0xff]
    %v172 = vld [vmem:[#allocation11 + $0x88] sm:$0xff]
    %v173 = vld [vmem:[#allocation11 + $0x90] sm:$0xff]
    %v174 = vld [vmem:[#allocation11 + $0x98] sm:$0xff]
    %v175 = vld [vmem:[#allocation11 + $0xa0] sm:$0xff]
    %v176 = vld [vmem:[#allocation11 + $0xa8] sm:$0xff]
    %v177 = vld [vmem:[#allocation11 + $0xb0] sm:$0xff]
    %v178 = vld [vmem:[#allocation11 + $0xb8] sm:$0xff]
    %v179 = vld [vmem:[#allocation11 + $0xc0] sm:$0xff]
    %v180 = vld [vmem:[#allocation11 + $0xc8] sm:$0xff]
    %v181 = vld [vmem:[#allocation11 + $0xd0] sm:$0xff]
    %v182 = vld [vmem:[#allocation11 + $0xd8] sm:$0xff]
    %v183 = vld [vmem:[#allocation11 + $0xe0] sm:$0xff]
    %v184 = vld [vmem:[#allocation11 + $0xe8] sm:$0xff]
    %v185 = vld [vmem:[#allocation11 + $0xf0] sm:$0xff]
    %v186 = vld [vmem:[#allocation11 + $0xf8] sm:$0xff]
    %v187 = vld [vmem:[%s6] sm:$0x1]
    %v188 = vld [vmem:[#allocation2] sm:$0xff]
    %v189 = vld [vmem:[#allocation2 + $0x8] sm:$0xff]
    %v191 = vperm.slane %v121, 0
    %vm193 = vcmask 261120
    %v195 = vsel %vm193, %v188, 0
    %v198 = vsel %vm193, %v189, 0
    %200 = vmatpush.msra.mxu0 0.0
    %201 = vmatpush.msra.mxu0 0.0
    %202 = vmatpush.msra.mxu0 0.0
    %203 = vmatpush.msra.mxu0 0.0
    %204 = vmatpush.msra.mxu0 0.0
    %205 = vmatpush.msra.mxu0 0.0
    %206 = vmatpush.msra.mxu0 0.0
    %207 = vmatpush.msra.mxu0 0.0
    %208 = vmatpush.msra.mxu0 0.0
    %209 = vmatpush.msra.mxu0 0.0
    %210 = vmatpush.msra.mxu0 0.0
    %211 = vmatpush.msra.mxu0 0.0
    %212 = vmatpush.msra.mxu0 %v120
    %213 = vmatpush.msra.mxu0 %v119
    %214 = vmatpush.msra.mxu0 %v118
    %215 = vmatpush.msra.mxu0 %v117
    %216 = vmatmul.f32.gmra.mxu0 %v195
    %v217 = vpop.f32.mrf.mxu0
    %v218 = vadd.f32 %v191, %v217
    %219 = vmatmul.f32.gmra.mxu0 %v198
    %v220 = vpop.f32.mrf.mxu0
    %v221 = vadd.f32 %v191, %v220
    %222 = vdwg.mxu0
    %v223 = vmax.f32 %v218, 0.0
    %v224 = vmax.f32 %v221, 0.0
    %v226 = vperm.slane %v154, 0
    %v227 = vperm.slane %v154, 1
    %230 = vmatpush.msra.mxu0 %v152
    %231 = vmatpush.msra.mxu0 %v150
    %232 = vmatpush.msra.mxu0 %v148
    %233 = vmatpush.msra.mxu0 %v146
    %234 = vmatpush.msra.mxu0 %v144
    %235 = vmatpush.msra.mxu0 %v142
    %236 = vmatpush.msra.mxu0 %v140
    %237 = vmatpush.msra.mxu0 %v138
    %238 = vmatpush.msra.mxu0 %v136
    %239 = vmatpush.msra.mxu0 %v134
    %240 = vmatpush.msra.mxu0 %v132
    %241 = vmatpush.msra.mxu0 %v130
    %242 = vmatpush.msra.mxu0 %v128
    %243 = vmatpush.msra.mxu0 %v126
    %244 = vmatpush.msra.mxu0 %v124
    %245 = vmatpush.msra.mxu0 %v122
    %246 = vmatmul.f32.gmra.mxu0 %v223
    %v247 = vpop.f32.mrf.mxu0
    %v248 = vadd.f32 %v226, %v247
    %249 = vmatmul.f32.gmra.mxu0 %v224
    %v250 = vpop.f32.mrf.mxu0
    %v251 = vadd.f32 %v226, %v250
    %252 = vdwg.mxu0
    %253 = vmatpush.msra.mxu0 %v153
    %254 = vmatpush.msra.mxu0 %v151
    %255 = vmatpush.msra.mxu0 %v149
    %256 = vmatpush.msra.mxu0 %v147
    %257 = vmatpush.msra.mxu0 %v145
    %258 = vmatpush.msra.mxu0 %v143
    %259 = vmatpush.msra.mxu0 %v141
    %260 = vmatpush.msra.mxu0 %v139
    %261 = vmatpush.msra.mxu0 %v137
    %262 = vmatpush.msra.mxu0 %v135
    %263 = vmatpush.msra.mxu0 %v133
    %264 = vmatpush.msra.mxu0 %v131
    %265 = vmatpush.msra.mxu0 %v129
    %266 = vmatpush.msra.mxu0 %v127
    %267 = vmatpush.msra.mxu0 %v125
    %268 = vmatpush.msra.mxu0 %v123
    %269 = vmatmul.f32.gmra.mxu0 %v223
    %v270 = vpop.f32.mrf.mxu0
    %v271 = vadd.f32 %v227, %v270
    %272 = vmatmul.f32.gmra.mxu0 %v224
    %v273 = vpop.f32.mrf.mxu0
    %v274 = vadd.f32 %v227, %v273
    %275 = vdwg.mxu0
    %v276 = vmax.f32 %v248, 0.0
    %v277 = vmax.f32 %v271, 0.0
    %v278 = vmax.f32 %v251, 0.0
    %v279 = vmax.f32 %v274, 0.0
    %v281 = vperm.slane %v187, 0
    %283 = vmatpush.msra.mxu0 %v170
    %284 = vmatpush.msra.mxu0 %v169
    %285 = vmatpush.msra.mxu0 %v168
    %286 = vmatpush.msra.mxu0 %v167
    %287 = vmatpush.msra.mxu0 %v166
    %288 = vmatpush.msra.mxu0 %v165
    %289 = vmatpush.msra.mxu0 %v164
    %290 = vmatpush.msra.mxu0 %v163
    %291 = vmatpush.msra.mxu0 %v162
    %292 = vmatpush.msra.mxu0 %v161
    %293 = vmatpush.msra.mxu0 %v160
    %294 = vmatpush.msra.mxu0 %v159
    %295 = vmatpush.msra.mxu0 %v158
    %296 = vmatpush.msra.mxu0 %v157
    %297 = vmatpush.msra.mxu0 %v156
    %298 = vmatpush.msra.mxu0 %v155
    %299 = vmatmul.f32.gmra.mxu0 %v276
    %v300 = vpop.f32.mrf.mxu0
    %v301 = vadd.f32 %v281, %v300
    %302 = vmatmul.f32.gmra.mxu0 %v278
    %v303 = vpop.f32.mrf.mxu0
    %v304 = vadd.f32 %v281, %v303
    %305 = vdwg.mxu0
    %306 = vmatpush.msra.mxu0 %v186
    %307 = vmatpush.msra.mxu0 %v185
    %308 = vmatpush.msra.mxu0 %v184
    %309 = vmatpush.msra.mxu0 %v183
    %310 = vmatpush.msra.mxu0 %v182
    %311 = vmatpush.msra.mxu0 %v181
    %312 = vmatpush.msra.mxu0 %v180
    %313 = vmatpush.msra.mxu0 %v179
    %314 = vmatpush.msra.mxu0 %v178
    %315 = vmatpush.msra.mxu0 %v177
    %316 = vmatpush.msra.mxu0 %v176
    %317 = vmatpush.msra.mxu0 %v175
    %318 = vmatpush.msra.mxu0 %v174
    %319 = vmatpush.msra.mxu0 %v173
    %320 = vmatpush.msra.mxu0 %v172
    %321 = vmatpush.msra.mxu0 %v171
    %322 = vmatmul.f32.gmra.mxu0 %v277
    %v323 = vpop.f32.mrf.mxu0
    %v324 = vadd.f32 %v301, %v323
    %325 = vmatmul.f32.gmra.mxu0 %v279
    %v326 = vpop.f32.mrf.mxu0
    %v327 = vadd.f32 %v304, %v326
    %328 = vdwg.mxu0
    %329 = vst [vmem:[#allocation13] sm:$0xff] %v324
    %330 = vst [vmem:[#allocation13 + $0x8] sm:$0xff] %v327
    // Predicated region
    $region54: #{_mlp_forward_impl.1} parent=1 // pred_check
      _
    $region55: #{_mlp_forward_impl.1} parent=1 // pred_check_branch
      %332 = sbr.rel (0) target = $region57
    $region56: #{_mlp_forward_impl.1} parent=1 // pred_region
      %334 = vsyncadd [#allocation4], 0
      %s335 = sshll.u32 [#allocation13], 4
      %s336 = int_to_ptr.vmem [resolvable:$true] %s335
      %s337 = sshll.u32 %s7, 4
      %s338 = int_to_ptr.hbm [resolvable:$true] %s337
      %343 = dma.vmem_to_hbm [thread:$0]  %s336, 256, %s338, [#allocation4], 128, 128, 8
    $region57: #{_mlp_forward_impl.1} parent=1 // pred_fallthru
      _
    // Predicated region
    $region58: #{_mlp_forward_impl.1} parent=1 // pred_check
      _
    $region59: #{_mlp_forward_impl.1} parent=1 // pred_check_branch
      %345 = sbr.rel (0) target = $region61
    $region60: #{_mlp_forward_impl.1} parent=1 // pred_region
      %347 = dma.done [#allocation4], 256
    $region61: #{_mlp_forward_impl.1} parent=1 // pred_fallthru
      _
    %348 = vsyncpa [#allocation3], 1
    %349 = vsyncpa [#allocation6], 1
    %350 = vsyncpa [#allocation9], 1
    %351 = vsyncpa [#allocation12], 1
    %352 = vsyncpa [#allocation4], 1

</llo_original>
